<compile_context>
chip_gen: v5e
topology: v5e:2x2
jax: 0.10.0
libtpu: 0.0.40
codegen_flags: <defaults>
</compile_context>

<pallas_src>
import functools

import jax
import jax.numpy as jnp
from jax import lax
from jax.experimental import pallas as pl
from jax.experimental.pallas import tpu as pltpu

NUM_GROUPS = 32
EPS = 1e-5


# ---------------------------------------------------------------------------- helpers
def _pick_tile(n, preferred, multiple=1):
    """Largest divisor of n that is <= preferred and (a multiple of `multiple` or == n)."""
    for t in range(min(n, preferred), 0, -1):
        if n % t == 0 and (t % multiple == 0 or t == n):
            return t
    return n


def _tpu_vmem_budget():
    """Generation-aware VMEM budget (v5e/v6e: 128 MiB, v7x: 64 MiB physical)."""
    try:
        cap = int(pltpu.get_tpu_info().vmem_capacity_bytes)
    except Exception:
        cap = 64 * 1024 * 1024          # conservative fallback (v7x-sized)
    return max(32 * 1024 * 1024, min(int(cap * 0.7), 96 * 1024 * 1024))


def _pick_cout_tile(cout, max_tile=256):
    """Prefer lane-dense (multiple-of-128) output-channel tiles of 128-256."""
    if cout <= max_tile:
        return cout
    for t in (256, 128):
        if cout % t == 0:
            return t
    return _pick_tile(cout, max_tile)


def _pick_row_tile(ho, w, cin, co_t, stride, x_isz, m_isz, o_isz, vmem_budget,
                   acc_budget=256 * 1024, cap=None):
    """Largest divisor of Ho keeping the f32 accumulator vreg-sized and VMEM in budget."""
    best = 1
    hi = min(ho, cap) if cap else ho
    for th in range(1, hi + 1):
        if ho % th:
            continue
        rows = stride * th + 2
        acc_bytes = th * w * co_t * 4                      # f32 accumulator (vreg bound)
        vmem = (2 * rows * (w + 2) * cin * x_isz           # double-buffered halo tile
                + rows * (w + 2) * cin * m_isz             # normalized staging tile
                + 2 * 9 * cin * co_t * m_isz               # weights (double buffered)
                + 2 * th * (w // stride) * co_t * o_isz    # output blocks
                + 2 * th * w * co_t * 4)                   # residual block (worst case)
        if acc_bytes <= acc_budget and vmem <= 0.6 * vmem_budget:
            best = th
    return best


# ---------------------------------------------------------------------------- GroupNorm
def _gn_sums_kernel(x_ref, out_ref):
    """Accumulate per-channel raw (sum, sum of squares) across row tiles."""
    @pl.when(pl.program_id(1) == 0)
    def _():
        out_ref[...] = jnp.zeros_like(out_ref)
    x = x_ref[0].astype(jnp.float32)                                    # (tm, C)
    s = jnp.concatenate([jnp.sum(x, axis=0, keepdims=True),
                         jnp.sum(x * x, axis=0, keepdims=True)], axis=0)
    out_ref[0] += s


def gn_partial_stats(x_nhwc, *, tile_m=512):
    """Standalone stats pass (only needed for the block input; all other GroupNorms
    get their raw sums from the producing conv's epilogue)."""
    B, H, W, C = x_nhwc.shape
    HW = H * W
    x2 = x_nhwc.reshape(B, HW, C)
    tm = _pick_tile(HW, tile_m, multiple=8)
    return pl.pallas_call(
        _gn_sums_kernel,
        out_shape=jax.ShapeDtypeStruct((B, 2, C), jnp.float32),
        grid=(B, HW // tm),
        in_specs=[pl.BlockSpec((1, tm, C), lambda b, m: (b, m, 0))],
        out_specs=pl.BlockSpec((1, 2, C), lambda b, m: (b, 0, 0)),
        compiler_params=pltpu.CompilerParams(
            dimension_semantics=("parallel", "arbitrary")),
    )(x2)


def _gn_finalize_kernel(s_ref, m_ref, mt_ref, g_ref, b_ref, out_ref, *, inv_n, eps):
    sums = s_ref[0]                                                     # (2, C)
    gsum = jnp.dot(sums, m_ref[...], preferred_element_type=jnp.float32) * inv_n
    gmean = gsum[0:1, :]
    gvar = gsum[1:2, :] - gmean * gmean
    # TODO(synk): E[x^2]-mean^2 in f32 cancels badly for |mean| >> std; fine at SDXL scale.
    ginv = lax.rsqrt(gvar + eps)
    statc = jnp.dot(jnp.concatenate([gmean, ginv], axis=0), mt_ref[...],
                    preferred_element_type=jnp.float32)                 # (2, C)
    scale = g_ref[...] * statc[1:2, :]
    shift = b_ref[...] - statc[0:1, :] * scale
    out_ref[0] = jnp.concatenate([scale, shift], axis=0)


def gn_finalize(sums, gamma, beta, *, hw, num_groups=NUM_GROUPS, eps=EPS):
    """(B,2,C) raw (sum, sumsq) -> per-(batch, channel) affine (scale, shift)."""
    B, _, C = sums.shape
    G = num_groups
    cg = C // G
    mmat = (jnp.arange(C)[:, None] // cg == jnp.arange(G)[None, :]).astype(jnp.float32)
    mtmat = jnp.transpose(mmat)
    return pl.pallas_call(
        functools.partial(_gn_finalize_kernel, inv_n=1.0 / float(hw * cg), eps=eps),
        out_shape=jax.ShapeDtypeStruct((B, 2, C), jnp.float32),
        grid=(B,),
        in_specs=[
            pl.BlockSpec((1, 2, C), lambda b: (b, 0, 0)),
            pl.BlockSpec((C, G), lambda b: (0, 0)),
            pl.BlockSpec((G, C), lambda b: (0, 0)),
            pl.BlockSpec((1, C), lambda b: (0, 0)),
            pl.BlockSpec((1, C), lambda b: (0, 0)),
        ],
        out_specs=pl.BlockSpec((1, 2, C), lambda b: (b, 0, 0)),
        compiler_params=pltpu.CompilerParams(dimension_semantics=("parallel",)),
    )(sums, mmat, mtmat, gamma.reshape(1, C), beta.reshape(1, C))


# ---------------------------------------------------------------------------- time embedding
def _temb_proj_kernel(t_ref, w_ref, b_ref, out_ref, *, mdt):
    t = t_ref[...].astype(jnp.float32)
    t = t * jax.nn.sigmoid(t)                        # nonlinearity(temb) before the Linear
    out_ref[...] = (jnp.dot(t.astype(mdt), w_ref[...],
                            preferred_element_type=jnp.float32)
                    + b_ref[...]).astype(out_ref.dtype)


def time_emb_proj(temb, w_torch, bias, *, matmul_dtype=jnp.float32):
    """Linear on silu(temb).  w_torch layout (Cout, Tc)."""
    B, _ = temb.shape
    Cout = w_torch.shape[0]
    wt = jnp.transpose(w_torch).astype(matmul_dtype)
    return pl.pallas_call(
        functools.partial(_temb_proj_kernel, mdt=matmul_dtype),
        out_shape=jax.ShapeDtypeStruct((B, Cout), jnp.float32),
    )(temb, wt, bias.reshape(1, Cout).astype(jnp.float32))


# ---------------------------------------------------------------------------- fused conv
def _fused_conv_kernel(*refs, stride, th, n_h, h_in, w_in, cin, co_t,
                       apply_gn, has_temb, has_res, emit_stats, mdt):
    """Fused [GroupNorm+SiLU] + 3x3 conv (+bias, +temb, +residual, +GN-stats epilogue)."""
    it = iter(refs)
    x_hbm = next(it)                              # unpadded NHWC activation (pl.ANY / HBM)
    ss_ref = next(it) if apply_gn else None
    w_ref = next(it)
    b_ref = next(it)
    t_ref = next(it) if has_temb else None
    r_ref = next(it) if has_res else None
    out_ref = next(it)
    st_ref = next(it) if emit_stats else None
    xbuf = next(it)                               # (2, rows, W+2, cin) double-buffered halo
    ybuf = next(it)                               # (rows, W+2, cin) normalized staging
    sem = next(it)                                # DMA semaphores (2, 3)

    b = pl.program_id(0)
    h = pl.program_id(2)
    body = stride * th
    rows = body + 2
    wo = w_in // stride
    acc_m = th * w_in

    # -- manual halo DMA: body rows are always valid; 1-row top/bottom halos only when
    #    they exist inside the (unpadded) activation.  Wait descriptors are rebuilt from
    #    exactly the same parameters as the matching start.
    def copy_desc(kind, hf, slot):
        if kind == 0:                                 # body
            src_r, n_r, dst_r = hf * body, body, 1
        elif kind == 1:                               # top halo (1 row), only if hf > 0
            src_r, n_r, dst_r = hf * body - 1, 1, 0
        else:                                         # bottom halo (1 row), only if hf < n_h-1
            src_r, n_r, dst_r = hf * body + body, 1, body + 1
        return pltpu.make_async_copy(
            x_hbm.at[b, pl.ds(src_r, n_r)],
            xbuf.at[slot, pl.ds(dst_r, n_r), pl.ds(1, w_in), :],
            sem.at[slot, kind])

    slot = h % 2

    @pl.when(h == 0)                 # prime this (batch, cout-tile) chain (axis h must
    def _():                         # stay "arbitrary"; chain lives inside one group)
        copy_desc(0, 0, 0).start()
        if n_h > 1:
            copy_desc(2, 0, 0).start()

    @pl.when(h + 1 < n_h)            # prefetch the next row tile into the other slot
    def _():
        nslot = 1 - slot
        copy_desc(0, h + 1, nslot).start()
        copy_desc(1, h + 1, nslot).start()

        @pl.when(h + 1 < n_h - 1)
        def _():
            copy_desc(2, h + 1, nslot).start()

    copy_desc(0, h, slot).wait()

    @pl.when(h > 0)
    def _():
        copy_desc(1, h, slot).wait()

    @pl.when(h < n_h - 1)
    def _():
        copy_desc(2, h, slot).wait()

    # -- fused GroupNorm+SiLU (or passthrough) + zero-fill of the halo border in registers
    x = xbuf[slot].astype(jnp.float32)                                   # (rows, W+2, cin)
    pr = h * body + lax.broadcasted_iota(jnp.int32, (rows, w_in + 2, 1), 0)
    cc = lax.broadcasted_iota(jnp.int32, (rows, w_in + 2, 1), 1)
    valid = (pr >= 1) & (pr <= h_in) & (cc >= 1) & (cc <= w_in)
    if apply_gn:
        ss = ss_ref[0]                                                   # (2, cin)
        y = x * ss[0:1, :] + ss[1:2, :]
        y = y * jax.nn.sigmoid(y)                                        # SiLU
    else:
        y = x
    ybuf[...] = jnp.where(valid, y, 0.0).astype(mdt)

    # -- 9-tap conv as shifted-slice matmuls, f32 accumulation (vreg-resident acc)
    acc = jnp.zeros((acc_m, co_t), jnp.float32)
    for dy in range(3):
        for dx in range(3):
            if stride == 1:
                patch = ybuf[dy:dy + th, dx:dx + w_in, :]
            else:
                v = ybuf[dy:dy + 2 * th, dx:dx + w_in, :]
                patch = v.reshape(th, 2, w_in, cin)[:, 0]                # stride-2 rows
            acc = acc + jnp.dot(patch.reshape(acc_m, cin), w_ref[3 * dy + dx],
                                preferred_element_type=jnp.float32)

    acc = acc + b_ref[...]
    if has_temb:
        acc = acc + t_ref[0]
    if has_res:
        acc = acc + r_ref[0].reshape(acc_m, co_t).astype(jnp.float32)

    if emit_stats:
        # GroupNorm raw sums of THIS conv's output (post bias/temb/residual), fused here
        # so the next GroupNorm never re-reads the activation from HBM.
        @pl.when(h == 0)
        def _():
            st_ref[...] = jnp.zeros_like(st_ref)
        st_ref[0] += jnp.concatenate(
            [jnp.sum(acc, axis=0, keepdims=True),
             jnp.sum(acc * acc, axis=0, keepdims=True)], axis=0)

    acc3 = acc.reshape(th, w_in, co_t)
    if stride == 1:
        res = acc3
    else:
        # Stride-2 columns: select even columns with tiny (wo x w_in) 0/1 selector matmuls
        # (per output row), so the HBM write is halved and no XLA ::2 gather pass is needed.
        # TODO(synk): a fully deinterleaved even/odd-column staging buffer would also halve
        # the MXU work of this downsample conv.
        sel = (lax.broadcasted_iota(jnp.int32, (wo, w_in), 1) ==
               2 * lax.broadcasted_iota(jnp.int32, (wo, w_in), 0)).astype(jnp.float32)
        res = jnp.concatenate(
            [jnp.dot(sel, acc3[t], preferred_element_type=jnp.float32)[None]
             for t in range(th)], axis=0)
    out_ref[0] = res.astype(out_ref.dtype)


def fused_conv3x3(x, w_torch, bias, *, stride=1, scale_shift=None, temb_add=None,
                  residual=None, emit_stats=False, matmul_dtype=jnp.float32,
                  out_dtype=None, row_tile_cap=None):
    """3x3 conv (pad=1) with optional fused GroupNorm+SiLU on the input, bias, temb add,
    residual add and fused GroupNorm-statistics epilogue.  w_torch: (Cout, Cin, 3, 3)."""
    B, H, W, Cin = x.shape
    Cout = w_torch.shape[0]
    assert H % stride == 0 and W % stride == 0
    assert not (stride != 1 and (residual is not None or emit_stats))
    Ho, Wo = H // stride, W // stride
    out_dtype = out_dtype or x.dtype

    w9 = jnp.transpose(w_torch, (2, 3, 1, 0)).reshape(9, Cin, Cout).astype(matmul_dtype)
    apply_gn = scale_shift is not None
    has_temb = temb_add is not None
    has_res = residual is not None

    vmem_budget = _tpu_vmem_budget()
    co_t = _pick_cout_tile(Cout)
    n_co = Cout // co_t
    th = _pick_row_tile(Ho, W, Cin, co_t, stride,
                        jnp.dtype(x.dtype).itemsize, jnp.dtype(matmul_dtype).itemsize,
                        jnp.dtype(out_dtype).itemsize, vmem_budget, cap=row_tile_cap)
    n_h = Ho // th
    rows = stride * th + 2

    in_specs = [pl.BlockSpec(memory_space=pl.ANY)]        # raw HBM ref, manual halo DMA
    inputs = [x]
    if apply_gn:
        in_specs.append(pl.BlockSpec((1, 2, Cin), lambda b, c, hh: (b, 0, 0)))
        inputs.append(scale_shift)
    in_specs += [pl.BlockSpec((9, Cin, co_t), lambda b, c, hh: (0, 0, c)),
                 pl.BlockSpec((1, co_t), lambda b, c, hh: (0, c))]
    inputs += [w9, bias.reshape(1, Cout).astype(jnp.float32)]
    if has_temb:
        in_specs.append(pl.BlockSpec((1, 1, co_t), lambda b, c, hh: (b, 0, c)))
        inputs.append(temb_add.reshape(B, 1, Cout).astype(jnp.float32))
    if has_res:
        in_specs.append(pl.BlockSpec((1, th, W, co_t), lambda b, c, hh: (b, hh, 0, c)))
        inputs.append(residual)

    out_shapes = [jax.ShapeDtypeStruct((B, Ho, Wo, Cout), out_dtype)]
    out_specs = [pl.BlockSpec((1, th, Wo, co_t), lambda b, c, hh: (b, hh, 0, c))]
    if emit_stats:
        out_shapes.append(jax.ShapeDtypeStruct((B, 2, Cout), jnp.float32))
        out_specs.append(pl.BlockSpec((1, 2, co_t), lambda b, c, hh: (b, 0, c)))

    bytes_accessed = (int(x.size) * jnp.dtype(x.dtype).itemsize
                      + B * Ho * Wo * Cout * jnp.dtype(out_dtype).itemsize
                      + int(w9.size) * jnp.dtype(matmul_dtype).itemsize
                      + (int(residual.size) * jnp.dtype(residual.dtype).itemsize
                         if has_res else 0))
    cost = pl.CostEstimate(
        flops=2 * B * Ho * W * 9 * Cin * Cout,
        transcendentals=(B * H * W * Cin) if apply_gn else 0,
        bytes_accessed=int(bytes_accessed))

    kernel = functools.partial(
        _fused_conv_kernel, stride=stride, th=th, n_h=n_h, h_in=H, w_in=W,
        cin=Cin, co_t=co_t, apply_gn=apply_gn, has_temb=has_temb,
        has_res=has_res, emit_stats=emit_stats, mdt=matmul_dtype)

    return pl.pallas_call(
        kernel,
        out_shape=tuple(out_shapes) if emit_stats else out_shapes[0],
        grid=(B, n_co, n_h),
        in_specs=in_specs,
        out_specs=tuple(out_specs) if emit_stats else out_specs[0],
        scratch_shapes=[
            pltpu.VMEM((2, rows, W + 2, Cin), x.dtype),
            pltpu.VMEM((rows, W + 2, Cin), matmul_dtype),
            pltpu.SemaphoreType.DMA((2, 3)),
        ],
        compiler_params=pltpu.CompilerParams(
            dimension_semantics=("parallel", "parallel", "arbitrary"),
            vmem_limit_bytes=int(vmem_budget)),
        cost_estimate=cost,
    )(*inputs)


# ---------------------------------------------------------------------------- module
def resnet_block(x, temb, p, *, stats_in=None, emit_out_stats=False,
                 matmul_dtype=jnp.float32, row_tile_cap=None):
    """TtResnetBlock2D forward (in_channels == out_channels, no conv_shortcut)."""
    B, H, W, C = x.shape
    hw = H * W
    bf16 = jnp.dtype(matmul_dtype) == jnp.dtype(jnp.bfloat16)
    act_dtype = jnp.bfloat16 if bf16 else x.dtype      # intermediate (conv1) activation

    sums1 = stats_in if stats_in is not None else gn_partial_stats(x)
    ss1 = gn_finalize(sums1, p["gn1_g"], p["gn1_b"], hw=hw)
    tadd = time_emb_proj(temb, p["temb_w"], p["temb_b"], matmul_dtype=matmul_dtype)

    h1, sums2 = fused_conv3x3(x, p["conv1_w"], p["conv1_b"], stride=1,
                              scale_shift=ss1, temb_add=tadd, emit_stats=True,
                              matmul_dtype=matmul_dtype, out_dtype=act_dtype,
                              row_tile_cap=row_tile_cap)
    ss2 = gn_finalize(sums2, p["gn2_g"], p["gn2_b"], hw=hw)

    out = fused_conv3x3(h1, p["conv2_w"], p["conv2_b"], stride=1,
                        scale_shift=ss2, residual=x, emit_stats=emit_out_stats,
                        matmul_dtype=matmul_dtype, out_dtype=x.dtype,
                        row_tile_cap=row_tile_cap)
    if emit_out_stats:
        out, out_sums = out
        return out, out_sums
    return out, None


def down_block_2d(hidden_states, input_shape, temb, params, *,
                  matmul_dtype=jnp.float32, row_tile_cap=None):
    """Mirrors TtDownBlock2D.forward.  hidden_states is NHWC here."""
    B, C, H, W = input_shape
    output_states = ()
    h = hidden_states
    stats = None
    for i in range(2):
        # The raw GN sums of this resnet's output feed the next resnet's first GroupNorm.
        h, stats = resnet_block(h, temb, params["resnets"][i], stats_in=stats,
                                emit_out_stats=(i == 0), matmul_dtype=matmul_dtype,
                                row_tile_cap=row_tile_cap)
        output_states = output_states + (h,)
        # TODO(synk): ttnn.to_memory_config(DRAM) round-trips have no Pallas equivalent/need.
    h = fused_conv3x3(h, params["down"]["conv_w"], params["down"]["conv_b"], stride=2,
                      matmul_dtype=matmul_dtype, row_tile_cap=row_tile_cap)
    output_states = output_states + (h,)
    C, H, W = h.shape[3], h.shape[1], h.shape[2]
    return h, [C, H, W], output_states


# ---------------------------------------------------------------------------- params
def init_params(key, c, temb_ch):
    ks = jax.random.split(key, 24)
    n = lambda k, s, sc: sc * jax.random.normal(k, s, jnp.float32)
    resnets = []
    ki = 0
    for _ in range(2):
        resnets.append({
            "gn1_g": 1.0 + n(ks[ki + 0], (c,), 0.02),
            "gn1_b": n(ks[ki + 1], (c,), 0.02),
            "conv1_w": n(ks[ki + 2], (c, c, 3, 3), 0.05),
            "conv1_b": n(ks[ki + 3], (c,), 0.02),
            "temb_w": n(ks[ki + 4], (c, temb_ch), 0.05),
            "temb_b": n(ks[ki + 5], (c,), 0.02),
            "gn2_g": 1.0 + n(ks[ki + 6], (c,), 0.02),
            "gn2_b": n(ks[ki + 7], (c,), 0.02),
            "conv2_w": n(ks[ki + 8], (c, c, 3, 3), 0.05),
            "conv2_b": n(ks[ki + 9], (c,), 0.02),
        })
        ki += 10
    down = {"conv_w": n(ks[20], (c, c, 3, 3), 0.05),
            "conv_b": n(ks[21], (c,), 0.02)}
    return {"resnets": resnets, "down": down}


# ---------------------------------------------------------------------------- reference
def _ref_gn_silu(x, gamma, beta):
    B, H, W, C = x.shape
    xg = x.reshape(B, H * W, NUM_GROUPS, C // NUM_GROUPS)
    mean = xg.mean(axis=(1, 3), keepdims=True)
    var = jnp.mean((xg - mean) ** 2, axis=(1, 3), keepdims=True)
    y = ((xg - mean) * lax.rsqrt(var + EPS)).reshape(B, H, W, C) * gamma + beta
    return y * jax.nn.sigmoid(y)


def _ref_conv(x, w, b, stride):
    y = lax.conv_general_dilated(
        x, jnp.transpose(w, (2, 3, 1, 0)), (stride, stride), ((1, 1), (1, 1)),
        dimension_numbers=("NHWC", "HWIO", "NHWC"))
    return y + b


def _ref_resnet(x, temb, p):
    h = _ref_gn_silu(x, p["gn1_g"], p["gn1_b"])
    h = _ref_conv(h, p["conv1_w"], p["conv1_b"], 1)
    tp = jax.nn.silu(temb) @ p["temb_w"].T + p["temb_b"]
    h = h + tp[:, None, None, :]
    h = _ref_gn_silu(h, p["gn2_g"], p["gn2_b"])
    h = _ref_conv(h, p["conv2_w"], p["conv2_b"], 1)
    return x + h


def _ref_down_block(x, temb, params):
    outs = ()
    h = x
    for i in range(2):
        h = _ref_resnet(h, temb, params["resnets"][i])
        outs += (h,)
    h = _ref_conv(h, params["down"]["conv_w"], params["down"]["conv_b"], 2)
    outs += (h,)
    return h, outs


# ---------------------------------------------------------------------------- main
if __name__ == "__main__":
    B, C, H, W = 2, 64, 16, 16     # C must be a multiple of 32 (GroupNorm groups)
    TEMB = 128

    key = jax.random.PRNGKey(0)
    kx, kt, kp = jax.random.split(key, 3)
    x_nchw = jax.random.normal(kx, (B, C, H, W), jnp.float32)   # PyTorch NCHW input
    x = jnp.transpose(x_nchw, (0, 2, 3, 1))                     # -> NHWC kernel layout
    temb = jax.random.normal(kt, (B, TEMB), jnp.float32)
    params = init_params(kp, C, TEMB)

    ref_h, ref_outs = _ref_down_block(x, temb, params)

    # f32 path, small row tiles forced -> exercises the multi-tile halo-DMA prefetch chain
    h32, out_chw, outs32 = down_block_2d(x, (B, C, H, W), temb, params,
                                         matmul_dtype=jnp.float32, row_tile_cap=4)
    h32 = jax.block_until_ready(h32)
    assert out_chw == [C, H // 2, W // 2], out_chw
    err32 = float(jnp.max(jnp.abs(h32 - ref_h)))
    assert err32 < 2e-3, err32
    for a, r in zip(outs32, ref_outs):
        assert float(jnp.max(jnp.abs(a - r))) < 2e-3

    # bf16 MXU path (f32 accumulation, bf16 intermediate activations): loose tolerance
    hbf, _, _ = down_block_2d(x, (B, C, H, W), temb, params,
                              matmul_dtype=jnp.bfloat16)
    hbf = jax.block_until_ready(hbf)
    errbf = float(jnp.max(jnp.abs(hbf.astype(jnp.float32) - ref_h)))
    assert errbf < 0.5, errbf

    print("KERNEL_OK")
</pallas_src>

<mosaic_0001>
module attributes {stable_mosaic.version = 11 : i64} {
  func.func @_gn_sums_kernel(%arg0: i32, %arg1: i32, %arg2: memref<1x256x64xf32, #tpu.memory_space<vmem>>, %arg3: memref<1x2x64xf32, #tpu.memory_space<vmem>>) attributes {dimension_semantics = [#tpu.dimension_semantics<parallel>, #tpu.dimension_semantics<arbitrary>], iteration_bounds = array<i64: 2, 1>, scalar_prefetch = 0 : i64, scratch_operands = 0 : i64, tpu.core_type = #tpu.core_type<tc>, window_params = [{transform_indices = @transform_0, window_bounds = array<i64: 1, 256, 64>}, {transform_indices = @transform_1, window_bounds = array<i64: 1, 2, 64>}]} {
    %c0_i32 = arith.constant 0 : i32
    %0 = arith.cmpi eq, %arg1, %c0_i32 : i32
    %1 = arith.extui %0 : i1 to i32
    %c0_i32_0 = arith.constant 0 : i32
    %2 = arith.cmpi ne, %1, %c0_i32_0 : i32
    scf.if %2 {
      %cst_10 = arith.constant 0.000000e+00 : f32
      %17 = vector.broadcast %cst_10 : f32 to vector<1x2x64xf32>
      %c0_11 = arith.constant 0 : index
      %c0_12 = arith.constant 0 : index
      %c0_13 = arith.constant 0 : index
      %18 = vector.load %arg3[%c0_11, %c0_12, %c0_13] : memref<1x2x64xf32, #tpu.memory_space<vmem>>, vector<1x2x64xf32>
      tpu.vector_store %arg3[%c0_11, %c0_12, %c0_13], %17 {strides = array<i32>} : memref<1x2x64xf32, #tpu.memory_space<vmem>>, vector<1x2x64xf32>,
    } else {
    }
    %c0 = arith.constant 0 : index
    %c0_1 = arith.constant 0 : index
    %c0_2 = arith.constant 0 : index
    %3 = vector.load %arg2[%c0, %c0_1, %c0_2] : memref<1x256x64xf32, #tpu.memory_space<vmem>>, vector<1x256x64xf32>
    %4 = vector.shape_cast %3 : vector<1x256x64xf32> to vector<256x64xf32>
    %cst = arith.constant dense<0.000000e+00> : vector<64xf32>
    %5 = vector.multi_reduction <add>, %4, %cst [0] : vector<256x64xf32> to vector<64xf32>
    %6 = vector.shape_cast %5 : vector<64xf32> to vector<1x64xf32>
    %7 = arith.mulf %4, %4 : vector<256x64xf32>
    %cst_3 = arith.constant dense<0.000000e+00> : vector<64xf32>
    %8 = vector.multi_reduction <add>, %7, %cst_3 [0] : vector<256x64xf32> to vector<64xf32>
    %9 = vector.shape_cast %8 : vector<64xf32> to vector<1x64xf32>
    %10 = tpu.concatenate %6, %9 in 0 : vector<1x64xf32>, vector<1x64xf32> -> vector<2x64xf32>
    %c0_4 = arith.constant 0 : index
    %c0_5 = arith.constant 0 : index
    %c0_6 = arith.constant 0 : index
    %11 = vector.load %arg3[%c0_4, %c0_5, %c0_6] : memref<1x2x64xf32, #tpu.memory_space<vmem>>, vector<1x2x64xf32>
    %12 = vector.shape_cast %11 : vector<1x2x64xf32> to vector<2x64xf32>
    %13 = arith.addf %12, %10 : vector<2x64xf32>
    %c0_7 = arith.constant 0 : index
    %c0_8 = arith.constant 0 : index
    %c0_9 = arith.constant 0 : index
    %14 = vector.load %arg3[%c0_7, %c0_8, %c0_9] : memref<1x2x64xf32, #tpu.memory_space<vmem>>, vector<1x2x64xf32>
    %15 = vector.shape_cast %14 : vector<1x2x64xf32> to vector<2x64xf32>
    %16 = vector.shape_cast %13 : vector<2x64xf32> to vector<1x2x64xf32>
    tpu.vector_store %arg3[%c0_7, %c0_8, %c0_9], %16 {strides = array<i32>} : memref<1x2x64xf32, #tpu.memory_space<vmem>>, vector<1x2x64xf32>,
    return
  }
  func.func @transform_0(%arg0: i32, %arg1: i32) -> (i32, i32, i32) {
    %c0_i32 = arith.constant 0 : i32
    %c0_i32_0 = arith.constant 0 : i32
    return %arg0, %arg1, %c0_i32 : i32, i32, i32
  }
  func.func @transform_1(%arg0: i32, %arg1: i32) -> (i32, i32, i32) {
    %c0_i32 = arith.constant 0 : i32
    %c0_i32_0 = arith.constant 0 : i32
    %c0_i32_1 = arith.constant 0 : i32
    return %arg0, %c0_i32, %c0_i32_0 : i32, i32, i32
  }
}

</mosaic_0001>

<llo_original>
// kernel: tpu_custom_call.1
$region0: #{tpu_custom_call.1}
  #allocation0 [shape = 'u32[]', space=smem, size = 0x4, offset = 0x4, fixed_abs, tag = 'smem constant byte address 0x4 - core index']
  #allocation1 [shape = 'u32[72,128]{1,0:T(1,128)}', space=vmem, size = 0x9000, scoped, tag = 'internal scratch']
  %s0 = inlined_call_operand.vmem [shape: f32[2,256,64], index: 0, kind: input, shape index: {}]
  %s1 = inlined_call_operand.hbm [shape: f32[2,2,64], index: 1, kind: output, shape index: {}]
  %s2 = sld [smem:[#allocation0]]
  $region41: #{tpu_custom_call.1} parent=0
    _
  %s4 = ssub.s32 1, %s2
  %s5 = scalar_select 0, %s4, %s2
  $region1: #{tpu_custom_call.1} parent=0
    #allocation2 [shape = 'u8[2048]{0}', space=vmem, size = 0x800, scoped, tag = 'output window, operand 0']
    #allocation3 [shape = 's32[2]{0}', space=sflag, size = 0x8, scoped, tag = 'scoped memory for tpu_custom_call.1']
    %6 = vsyncpa [#allocation3], 0
    %s7 = scalar_lea.sflag [#allocation3], 1
    %8 = vsyncpa %s7, 0
    loop: start=0, step=1, limit=4
    $region2: #{tpu_custom_call.1} parent=1 // loop_pre_header
      _
    $region3: #{tpu_custom_call.1} parent=1 // loop_header
      %s10 = sphi 0, %s14
      %p11 = scmp.ge.s32.totalorder %s10, 4
      %s17 = sphi 0, %s29
      %s18 = sphi 0, %s25
      %s19 = sphi 0, %s17
      %s20 = sphi 0, %s18
      %s21 = sphi 0, %s19
      %s22 = sphi 0, %s20
      %s34 = sphi 0, %s36
      %s37 = sphi 0, %s34
      %s38 = sphi 0, %s37
      %s54 = sphi 0, %s38
      %s60 = sphi 0, %s62
      %s63 = sphi 0, %s60
      %s64 = sphi 0, %s63
      %s80 = sphi 0, %s64
    $region4: #{tpu_custom_call.1} parent=1 // loop_header_branch
      %13 = sbr.rel (%p11) target = $region8
    $region5: #{tpu_custom_call.1} parent=1 // loop_body
      %s15 = ssub.s32 %s10, 1
      %s16 = ssub.s32 %s10, 2
      %s23 = sadd.s32 1, %s18
      %p24 = scmp.ge.s32.totalorder %s23, 1
      %s25 = scalar_select %p24, 0, %s23
      %s26 = sadd.s32 1, %s17
      %s27 = scalar_select %p24, %s26, %s17
      %p28 = scmp.ge.s32.totalorder %s27, 2
      %s29 = scalar_select %p28, 0, %s27
      %s30 = ssub.s32 %s17, %s29
      %s31 = ssub.s32 %s18, %s25
      %s32 = sor.u32 %s30, %s31
      %p33 = scmp.eq.s32.totalorder %s32, 0
      %s35 = sadd.s32 %s34, 1
      %s36 = scalar_select %p33, %s34, %s35
      %p39 = pneg %p33
      %p40 = scmp.eq.s32.totalorder %s10, 1
      %p41 = por %p39, %p40
      %p42 = scmp.ne.s32.totalorder %s34, %s37
      %p43 = scmp.eq.s32.totalorder %s10, 0
      %p44 = por %p42, %p43
      %p45 = scmp.ne.s32.totalorder %s34, %s37
      %p46 = scmp.eq.s32.totalorder %s15, 1
      %p47 = por %p45, %p46
      %p48 = scmp.ne.s32.totalorder %s37, %s38
      %p49 = scmp.eq.s32.totalorder %s15, 0
      %p50 = por %p48, %p49
      %p51 = scmp.ne.s32.totalorder %s37, %s38
      %p52 = scmp.eq.s32.totalorder %s16, 1
      %p53 = por %p51, %p52
      %p55 = scmp.ne.s32.totalorder %s38, %s54
      %p56 = scmp.eq.s32.totalorder %s16, 0
      %p57 = por %p55, %p56
      %s58 = ssub.s32 %s17, %s29
      %p59 = scmp.eq.s32.totalorder %s58, 0
      %s61 = sadd.s32 %s60, 1
      %s62 = scalar_select %p59, %s60, %s61
      %p65 = pneg %p59
      %p66 = scmp.eq.s32.totalorder %s10, 1
      %p67 = por %p65, %p66
      %p68 = scmp.ne.s32.totalorder %s60, %s63
      %p69 = scmp.eq.s32.totalorder %s10, 0
      %p70 = por %p68, %p69
      %p71 = scmp.ne.s32.totalorder %s60, %s63
      %p72 = scmp.eq.s32.totalorder %s15, 1
      %p73 = por %p71, %p72
      %p74 = scmp.ne.s32.totalorder %s63, %s64
      %p75 = scmp.eq.s32.totalorder %s15, 0
      %p76 = por %p74, %p75
      %p77 = scmp.ne.s32.totalorder %s63, %s64
      %p78 = scmp.eq.s32.totalorder %s16, 1
      %p79 = por %p77, %p78
      %p81 = scmp.ne.s32.totalorder %s64, %s80
      %p82 = scmp.eq.s32.totalorder %s16, 0
      %p83 = por %p81, %p82
      %p84 = scmp.le.s32.totalorder 1, %s10
      %p85 = scmp.lt.s32.totalorder %s10, 3
      %p86 = pnand %p84, %p85
      %p87 = pneg %p86
      // Predicated region
      $region9: #{tpu_custom_call.1} parent=5 // pred_check
        _
      $region10: #{tpu_custom_call.1} parent=5 // pred_check_branch
        %89 = sbr.rel (%p86) target = $region12
      $region11: #{tpu_custom_call.1} parent=5 // pred_region
        %s90 = ssub.s32 %s10, 1
      $region12: #{tpu_custom_call.1} parent=5 // pred_fallthru
        _
      %p91 = scmp.lt.s32.totalorder %s10, 2
      // Predicated region
      $region13: #{tpu_custom_call.1} parent=5 // pred_check
        %p92 = pneg %p91
      $region14: #{tpu_custom_call.1} parent=5 // pred_check_branch
        %94 = sbr.rel (%p92) target = $region16
      $region15: #{tpu_custom_call.1} parent=5 // pred_region
        // Predicated region
        $region17: #{tpu_custom_call.1} parent=15 // pred_check
          %p95 = pneg %p44
        $region18: #{tpu_custom_call.1} parent=15 // pred_check_branch
          %97 = sbr.rel (%p95) target = $region20
        $region19: #{tpu_custom_call.1} parent=15 // pred_region
          %s98 = smul.u32 32, %s18
          %p99 = scmp.lt.s32.totalorder %s17, 1
          %s100 = scalar_select %p99, %s17, 1
          %p101 = scmp.lt.s32.totalorder %s98, 31
          %s102 = scalar_select %p101, %s98, 31
          %s103 = smul.addr %s100, 32
          %s104 = sadd.s32 %s102, %s103
          %s105 = smul.addr %s104, 8
          %s106 = scalar_lea.vmem %s0, %s105
          %s107 = smul.u32 32, %s18
        $region20: #{tpu_custom_call.1} parent=15 // pred_fallthru
          _
      $region16: #{tpu_custom_call.1} parent=5 // pred_fallthru
        _
      %p108 = scmp.le.s32.totalorder 1, %s10
      %p109 = scmp.lt.s32.totalorder %s10, 3
      %p110 = pnand %p108, %p109
      %p111 = pneg %p110
      // Predicated region
      $region21: #{tpu_custom_call.1} parent=5 // pred_check
        _
      $region22: #{tpu_custom_call.1} parent=5 // pred_check_branch
        %113 = sbr.rel (%p110) target = $region24
      $region23: #{tpu_custom_call.1} parent=5 // pred_region
        %s114 = ssub.s32 %s10, 1
        %s115 = smul.u32 32, %s20
        %p116 = scmp.lt.s32.totalorder %s19, 1
        %s117 = scalar_select %p116, %s19, 1
        %p118 = scmp.lt.s32.totalorder %s115, 31
        %s119 = scalar_select %p118, %s115, 31
        %s120 = smul.addr %s117, 32
        %s121 = sadd.s32 %s119, %s120
        %s122 = smul.addr %s121, 8
        %s123 = scalar_lea.vmem %s0, %s122
        %p124 = pneg %p50
        %p125 = pneg %p47
        %p126 = pneg %p76
        %p127 = pneg %p73
        %s128 = sand.u32 %s63, 1
        %s129 = scalar_lea.sflag [#allocation3], %s128
        %s130 = sand.u32 %s63, 1
        %s131 = smul.addr %s130, 2
        %s132 = scalar_lea.vmem [#allocation2], %s131
        %s133 = smul.u32 32, %s20
        %p134 = scmp.lt.s32.totalorder %s19, 1
        %s135 = scalar_select %p134, %s19, 1
        %p136 = scmp.lt.s32.totalorder %s133, 31
        %s137 = scalar_select %p136, %s133, 31
        %s138 = smul.addr %s135, 32
        %s139 = sadd.s32 %s137, %s138
        %s140 = smul.addr %s139, 8
        %s141 = scalar_lea.vmem %s0, %s140
        %s142 = smul.u32 32, %s20
        %p143 = scmp.eq.s32.totalorder %s20, 0
        // Predicated region
        $region25: #{tpu_custom_call.1} parent=23 // pred_check
          %p144 = pneg %p143
        $region26: #{tpu_custom_call.1} parent=23 // pred_check_branch
          %146 = sbr.rel (%p144) target = $region28
        $region27: #{tpu_custom_call.1} parent=23 // pred_region
          %vm147 = vcmask 517120
          %148 = vst.msk [vmem:[%s132] sm:$0x3] %vm147, 0.0
        $region28: #{tpu_custom_call.1} parent=23 // pred_fallthru
          _
        %v149 = vld [vmem:[%s141] sm:$0xff]
        %v150 = vld [vmem:[%s141 + $0x8] sm:$0xff]
        %v151 = vld [vmem:[%s141 + $0x10] sm:$0xff]
        %v152 = vld [vmem:[%s141 + $0x18] sm:$0xff]
        %v153 = vld [vmem:[%s141 + $0x20] sm:$0xff]
        %v154 = vld [vmem:[%s141 + $0x28] sm:$0xff]
        %v155 = vld [vmem:[%s141 + $0x30] sm:$0xff]
        %v156 = vld [vmem:[%s141 + $0x38] sm:$0xff]
        %v157 = vld [vmem:[%s141 + $0x40] sm:$0xff]
        %v158 = vld [vmem:[%s141 + $0x48] sm:$0xff]
        %v159 = vld [vmem:[%s141 + $0x50] sm:$0xff]
        %v160 = vld [vmem:[%s141 + $0x58] sm:$0xff]
        %v161 = vld [vmem:[%s141 + $0x60] sm:$0xff]
        %v162 = vld [vmem:[%s141 + $0x68] sm:$0xff]
        %v163 = vld [vmem:[%s141 + $0x70] sm:$0xff]
        %v164 = vld [vmem:[%s141 + $0x78] sm:$0xff]
        %v165 = vld [vmem:[%s141 + $0x80] sm:$0xff]
        %v166 = vld [vmem:[%s141 + $0x88] sm:$0xff]
        %v167 = vld [vmem:[%s141 + $0x90] sm:$0xff]
        %v168 = vld [vmem:[%s141 + $0x98] sm:$0xff]
        %v169 = vld [vmem:[%s141 + $0xa0] sm:$0xff]
        %v170 = vld [vmem:[%s141 + $0xa8] sm:$0xff]
        %v171 = vld [vmem:[%s141 + $0xb0] sm:$0xff]
        %v172 = vld [vmem:[%s141 + $0xb8] sm:$0xff]
        %v173 = vld [vmem:[%s141 + $0xc0] sm:$0xff]
        %v174 = vld [vmem:[%s141 + $0xc8] sm:$0xff]
        %v175 = vld [vmem:[%s141 + $0xd0] sm:$0xff]
        %v176 = vld [vmem:[%s141 + $0xd8] sm:$0xff]
        %v177 = vld [vmem:[%s141 + $0xe0] sm:$0xff]
        %v178 = vld [vmem:[%s141 + $0xe8] sm:$0xff]
        %v179 = vld [vmem:[%s141 + $0xf0] sm:$0xff]
        %v180 = vld [vmem:[%s141 + $0xf8] sm:$0xff]
        %vm181 = vcmask 523264
        %v182 = vsel %vm181, %v149, 0.0
        %v183 = vsel %vm181, %v150, 0.0
        %v184 = vadd.f32 %v182, %v183
        %v185 = vsel %vm181, %v151, 0.0
        %v186 = vadd.f32 %v184, %v185
        %v187 = vsel %vm181, %v152, 0.0
        %v188 = vadd.f32 %v186, %v187
        %v189 = vsel %vm181, %v153, 0.0
        %v190 = vadd.f32 %v188, %v189
        %v191 = vsel %vm181, %v154, 0.0
        %v192 = vadd.f32 %v190, %v191
        %v193 = vsel %vm181, %v155, 0.0
        %v194 = vadd.f32 %v192, %v193
        %v195 = vsel %vm181, %v156, 0.0
        %v196 = vadd.f32 %v194, %v195
        %v197 = vsel %vm181, %v157, 0.0
        %v198 = vadd.f32 %v196, %v197
        %v199 = vsel %vm181, %v158, 0.0
        %v200 = vadd.f32 %v198, %v199
        %v201 = vsel %vm181, %v159, 0.0
        %v202 = vadd.f32 %v200, %v201
        %v203 = vsel %vm181, %v160, 0.0
        %v204 = vadd.f32 %v202, %v203
        %v205 = vsel %vm181, %v161, 0.0
        %v206 = vadd.f32 %v204, %v205
        %v207 = vsel %vm181, %v162, 0.0
        %v208 = vadd.f32 %v206, %v207
        %v209 = vsel %vm181, %v163, 0.0
        %v210 = vadd.f32 %v208, %v209
        %v211 = vsel %vm181, %v164, 0.0
        %v212 = vadd.f32 %v210, %v211
        %v213 = vsel %vm181, %v165, 0.0
        %v214 = vadd.f32 %v212, %v213
        %v215 = vsel %vm181, %v166, 0.0
        %v216 = vadd.f32 %v214, %v215
        %v217 = vsel %vm181, %v167, 0.0
        %v218 = vadd.f32 %v216, %v217
        %v219 = vsel %vm181, %v168, 0.0
        %v220 = vadd.f32 %v218, %v219
        %v221 = vsel %vm181, %v169, 0.0
        %v222 = vadd.f32 %v220, %v221
        %v223 = vsel %vm181, %v170, 0.0
        %v224 = vadd.f32 %v222, %v223
        %v225 = vsel %vm181, %v171, 0.0
        %v226 = vadd.f32 %v224, %v225
        %v227 = vsel %vm181, %v172, 0.0
        %v228 = vadd.f32 %v226, %v227
        %v229 = vsel %vm181, %v173, 0.0
        %v230 = vadd.f32 %v228, %v229
        %v231 = vsel %vm181, %v174, 0.0
        %v232 = vadd.f32 %v230, %v231
        %v233 = vsel %vm181, %v175, 0.0
        %v234 = vadd.f32 %v232, %v233
        %v235 = vsel %vm181, %v176, 0.0
        %v236 = vadd.f32 %v234, %v235
        %v237 = vsel %vm181, %v177, 0.0
        %v238 = vadd.f32 %v236, %v237
        %v239 = vsel %vm181, %v178, 0.0
        %v240 = vadd.f32 %v238, %v239
        %v241 = vsel %vm181, %v179, 0.0
        %v242 = vadd.f32 %v240, %v241
        %v243 = vsel %vm181, %v180, 0.0
        %v244 = vadd.f32 %v242, %v243
        %v245 = vrot.slane %v244, 4
        %v246 = vadd.f32 %v244, %v245
        %v247 = vrot.slane %v246, 2
        %v248 = vadd.f32 %v246, %v247
        %v249 = vrot.slane %v248, 1
        %v250 = vadd.f32 %v248, %v249
        %v251 = vmul.f32 %v149, %v149
        %v252 = vmul.f32 %v150, %v150
        %v253 = vmul.f32 %v151, %v151
        %v254 = vmul.f32 %v152, %v152
        %v255 = vmul.f32 %v153, %v153
        %v256 = vmul.f32 %v154, %v154
        %v257 = vmul.f32 %v155, %v155
        %v258 = vmul.f32 %v156, %v156
        %v259 = vmul.f32 %v157, %v157
        %v260 = vmul.f32 %v158, %v158
        %v261 = vmul.f32 %v159, %v159
        %v262 = vmul.f32 %v160, %v160
        %v263 = vmul.f32 %v161, %v161
        %v264 = vmul.f32 %v162, %v162
        %v265 = vmul.f32 %v163, %v163
        %v266 = vmul.f32 %v164, %v164
        %v267 = vmul.f32 %v165, %v165
        %v268 = vmul.f32 %v166, %v166
        %v269 = vmul.f32 %v167, %v167
        %v270 = vmul.f32 %v168, %v168
        %v271 = vmul.f32 %v169, %v169
        %v272 = vmul.f32 %v170, %v170
        %v273 = vmul.f32 %v171, %v171
        %v274 = vmul.f32 %v172, %v172
        %v275 = vmul.f32 %v173, %v173
        %v276 = vmul.f32 %v174, %v174
        %v277 = vmul.f32 %v175, %v175
        %v278 = vmul.f32 %v176, %v176
        %v279 = vmul.f32 %v177, %v177
        %v280 = vmul.f32 %v178, %v178
        %v281 = vmul.f32 %v179, %v179
        %v282 = vmul.f32 %v180, %v180
        %v283 = vsel %vm181, %v251, 0.0
        %v284 = vsel %vm181, %v252, 0.0
        %v285 = vadd.f32 %v283, %v284
        %v286 = vsel %vm181, %v253, 0.0
        %v287 = vadd.f32 %v285, %v286
        %v288 = vsel %vm181, %v254, 0.0
        %v289 = vadd.f32 %v287, %v288
        %v290 = vsel %vm181, %v255, 0.0
        %v291 = vadd.f32 %v289, %v290
        %v292 = vsel %vm181, %v256, 0.0
        %v293 = vadd.f32 %v291, %v292
        %v294 = vsel %vm181, %v257, 0.0
        %v295 = vadd.f32 %v293, %v294
        %v296 = vsel %vm181, %v258, 0.0
        %v297 = vadd.f32 %v295, %v296
        %v298 = vsel %vm181, %v259, 0.0
        %v299 = vadd.f32 %v297, %v298
        %v300 = vsel %vm181, %v260, 0.0
        %v301 = vadd.f32 %v299, %v300
        %v302 = vsel %vm181, %v261, 0.0
        %v303 = vadd.f32 %v301, %v302
        %v304 = vsel %vm181, %v262, 0.0
        %v305 = vadd.f32 %v303, %v304
        %v306 = vsel %vm181, %v263, 0.0
        %v307 = vadd.f32 %v305, %v306
        %v308 = vsel %vm181, %v264, 0.0
        %v309 = vadd.f32 %v307, %v308
        %v310 = vsel %vm181, %v265, 0.0
        %v311 = vadd.f32 %v309, %v310
        %v312 = vsel %vm181, %v266, 0.0
        %v313 = vadd.f32 %v311, %v312
        %v314 = vsel %vm181, %v267, 0.0
        %v315 = vadd.f32 %v313, %v314
        %v316 = vsel %vm181, %v268, 0.0
        %v317 = vadd.f32 %v315, %v316
        %v318 = vsel %vm181, %v269, 0.0
        %v319 = vadd.f32 %v317, %v318
        %v320 = vsel %vm181, %v270, 0.0
        %v321 = vadd.f32 %v319, %v320
        %v322 = vsel %vm181, %v271, 0.0
        %v323 = vadd.f32 %v321, %v322
        %v324 = vsel %vm181, %v272, 0.0
        %v325 = vadd.f32 %v323, %v324
        %v326 = vsel %vm181, %v273, 0.0
        %v327 = vadd.f32 %v325, %v326
        %v328 = vsel %vm181, %v274, 0.0
        %v329 = vadd.f32 %v327, %v328
        %v330 = vsel %vm181, %v275, 0.0
        %v331 = vadd.f32 %v329, %v330
        %v332 = vsel %vm181, %v276, 0.0
        %v333 = vadd.f32 %v331, %v332
        %v334 = vsel %vm181, %v277, 0.0
        %v335 = vadd.f32 %v333, %v334
        %v336 = vsel %vm181, %v278, 0.0
        %v337 = vadd.f32 %v335, %v336
        %v338 = vsel %vm181, %v279, 0.0
        %v339 = vadd.f32 %v337, %v338
        %v340 = vsel %vm181, %v280, 0.0
        %v341 = vadd.f32 %v339, %v340
        %v342 = vsel %vm181, %v281, 0.0
        %v343 = vadd.f32 %v341, %v342
        %v344 = vsel %vm181, %v282, 0.0
        %v345 = vadd.f32 %v343, %v344
        %v346 = vrot.slane %v345, 4
        %v347 = vadd.f32 %v345, %v346
        %v348 = vrot.slane %v347, 2
        %v349 = vadd.f32 %v347, %v348
        %v350 = vrot.slane %v349, 1
        %v351 = vadd.f32 %v349, %v350
        %vm352 = vcmask 1040384
        %v353 = vsel %vm352, %v250, %v351
        %v354 = vld [vmem:[%s132] sm:$0x3]
        %v355 = vadd.f32 %v354, %v353
        %vm356 = vcmask 517120
        %357 = vst.msk [vmem:[%s132] sm:$0x3] %vm356, %v355
        %s358 = sand.u32 %s63, 1
        %s359 = scalar_lea.sflag [#allocation3], %s358
        %s360 = sand.u32 %s63, 1
        %s361 = smul.addr %s360, 2
        %s362 = scalar_lea.vmem [#allocation2], %s361
        // Predicated region
        $region29: #{tpu_custom_call.1} parent=23 // pred_check
          %p363 = pneg %p73
        $region30: #{tpu_custom_call.1} parent=23 // pred_check_branch
          %365 = sbr.rel (%p363) target = $region32
        $region31: #{tpu_custom_call.1} parent=23 // pred_region
          %367 = vsyncadd %s359, 0
          %s368 = smul.addr %s19, 2
          %s369 = scalar_lea.hbm %s1, %s368
          %s371 = sshll.u32 %s362, 4
          %s372 = int_to_ptr.vmem [resolvable:$true] %s371
          %s373 = sshll.u32 %s369, 4
          %s374 = int_to_ptr.hbm [resolvable:$true] %s373
          %376 = dma.vmem_to_hbm [thread:$0]  %s372, 32, %s374, %s359
        $region32: #{tpu_custom_call.1} parent=23 // pred_fallthru
          _
      $region24: #{tpu_custom_call.1} parent=5 // pred_fallthru
        _
      %p377 = scmp.le.s32.totalorder 2, %s10
      // Predicated region
      $region33: #{tpu_custom_call.1} parent=5 // pred_check
        %p378 = pneg %p377
      $region34: #{tpu_custom_call.1} parent=5 // pred_check_branch
        %380 = sbr.rel (%p378) target = $region36
      $region35: #{tpu_custom_call.1} parent=5 // pred_region
        %s381 = ssub.s32 %s10, 2
        // Predicated region
        $region37: #{tpu_custom_call.1} parent=35 // pred_check
          %p382 = pneg %p79
        $region38: #{tpu_custom_call.1} parent=35 // pred_check_branch
          %384 = sbr.rel (%p382) target = $region40
        $region39: #{tpu_custom_call.1} parent=35 // pred_region
          %s385 = sand.u32 %s64, 1
          %s386 = scalar_lea.sflag [#allocation3], %s385
          %s387 = sand.u32 %s64, 1
          %s388 = smul.addr %s387, 2
          %s389 = scalar_lea.vmem [#allocation2], %s388
          %391 = dma.done %s386, 32
        $region40: #{tpu_custom_call.1} parent=35 // pred_fallthru
          _
      $region36: #{tpu_custom_call.1} parent=5 // pred_fallthru
        _
    $region6: #{tpu_custom_call.1} parent=1 // loop_footer
      %s14 = sadd.s32 1, %s10
    $region7: #{tpu_custom_call.1} parent=1 // loop_footer_branch
      %9 = sbr.rel target = $region3
    $region8: #{tpu_custom_call.1} parent=1 // loop_exit
      _
    %392 = vsyncpa [#allocation3], 1
    %s393 = scalar_lea.sflag [#allocation3], 1
    %394 = vsyncpa %s393, 1

</llo_original>
